<compile_context>
chip_gen: v6e
topology: v6e:2x2x1
jax: 0.10.0
libtpu: 0.0.40
codegen_flags: <defaults>
</compile_context>

<pallas_src>
import jax
import jax.numpy as jnp
from jax.experimental import pallas as pl
from jax.experimental.pallas import tpu as pltpu


def _mlp_kernel(x_ref, w1_ref, b1_ref, w2_ref, b2_ref, w3_ref, b3_ref, o_ref):
    # Layer 1: bf16 MXU matmul, f32 accumulation, f32 bias + ReLU epilogue.
    h1 = jnp.dot(x_ref[...], w1_ref[...], preferred_element_type=jnp.float32)
    h1 = jnp.maximum(h1 + b1_ref[...], 0.0)
    # TODO(synk): nn.Dropout(p) is stochastic in training mode (PyTorch RNG);
    # implemented here with eval-mode identity semantics (would need
    # pltpu.prng_seed / pltpu.prng_random_bits for train-mode parity).

    # Layer 2: same bf16-in / f32-accumulate pattern.
    h2 = jnp.dot(h1.astype(jnp.bfloat16), w2_ref[...],
                 preferred_element_type=jnp.float32)
    h2 = jnp.maximum(h2 + b2_ref[...], 0.0)

    # Output head (H2 -> 1): computed as (1, H2) @ (H2, tb) so the result is a
    # lane-dense (1, tb) row instead of a lane-sparse (tb, 1) column. The head
    # is a negligible fraction of the FLOPs, so it stays in f32.
    head = jnp.dot(w3_ref[...], h2.T, preferred_element_type=jnp.float32)
    o_ref[0] = head + b3_ref[0]


def grapharma_forward(x, params, *, tb=512):
    """GraPharmaNN forward pass in a single Pallas kernel.

    x: (B, D_in) float32
    params: dict with w1 (D_in, H1), b1 (1, H1), w2 (H1, H2), b2 (1, H2),
            w3 (H2, 1), b3 (1, 1)  -- nn.Linear weights pre-transposed to (in, out).
    """
    B, D_in = x.shape
    w1, b1 = params["w1"], params["b1"]
    w2, b2 = params["w2"], params["b2"]
    w3, b3 = params["w3"], params["b3"]
    H1 = w1.shape[1]
    H2 = w2.shape[1]

    # Small batches -> one resident grid step; large batches -> big MXU-filling tiles.
    tb = min(tb, B)
    num_tiles = pl.cdiv(B, tb)

    # bf16 operands for the two big matmuls (accumulation stays f32 in-kernel).
    xb = x.astype(jnp.bfloat16)
    w1b = w1.astype(jnp.bfloat16)
    w2b = w2.astype(jnp.bfloat16)
    b1f = b1.astype(jnp.float32)
    b2f = b2.astype(jnp.float32)
    w3r = w3.reshape(1, H2).astype(jnp.float32)   # head weight as a (1, H2) row
    b3s = b3.reshape(1).astype(jnp.float32)       # scalar bias -> SMEM

    out = pl.pallas_call(
        _mlp_kernel,
        out_shape=jax.ShapeDtypeStruct((num_tiles, 1, tb), jnp.float32),
        grid=(num_tiles,),
        in_specs=[
            pl.BlockSpec((tb, D_in), lambda i: (i, 0)),         # x tile (batch-tiled)
            pl.BlockSpec((D_in, H1), lambda i: (0, 0)),         # w1 (full, resident)
            pl.BlockSpec((1, H1), lambda i: (0, 0)),            # b1
            pl.BlockSpec((H1, H2), lambda i: (0, 0)),           # w2 (full, resident)
            pl.BlockSpec((1, H2), lambda i: (0, 0)),            # b2
            pl.BlockSpec((1, H2), lambda i: (0, 0)),            # w3 (as a row)
            pl.BlockSpec(memory_space=pltpu.MemorySpace.SMEM),  # b3 scalar in SMEM
        ],
        out_specs=pl.BlockSpec((1, 1, tb), lambda i: (i, 0, 0)),  # lane-dense rows
        compiler_params=pltpu.CompilerParams(
            dimension_semantics=("parallel",),
        ),
    )(xb, w1b, b1f, w2b, b2f, w3r, b3s)

    # (num_tiles, 1, tb) -> (B, 1); drops any padded tail rows of the last tile.
    return out.reshape(-1)[:B].reshape(B, 1)


def init_params(key, input_dim, architecture=(512, 128)):
    """Deterministic init mimicking nn.Linear (uniform +/- 1/sqrt(fan_in))."""
    dims = [input_dim] + list(architecture) + [1]
    params = {}
    for idx, (din, dout) in enumerate(zip(dims[:-1], dims[1:]), start=1):
        key, kw, kb = jax.random.split(key, 3)
        bound = 1.0 / jnp.sqrt(jnp.float32(din))
        params[f"w{idx}"] = jax.random.uniform(
            kw, (din, dout), jnp.float32, minval=-bound, maxval=bound)
        params[f"b{idx}"] = jax.random.uniform(
            kb, (1, dout), jnp.float32, minval=-bound, maxval=bound)
    return params


def reference_forward(x, params):
    h1 = jnp.maximum(x @ params["w1"] + params["b1"], 0.0)
    h2 = jnp.maximum(h1 @ params["w2"] + params["b2"], 0.0)
    return h2 @ params["w3"] + params["b3"]


if __name__ == "__main__":
    key = jax.random.PRNGKey(0)
    key, kx = jax.random.split(key)

    B = 8            # small demo batch (clamped tile -> single grid step)
    INPUT_DIM = 32   # feature dim consistent with the module
    ARCH = (512, 128)  # default GraPharmaNN architecture

    params = init_params(key, INPUT_DIM, ARCH)
    x = jax.random.normal(kx, (B, INPUT_DIM), jnp.float32)

    out = grapharma_forward(x, params)
    out = jax.block_until_ready(out)

    ref = reference_forward(x, params)
    assert out.shape == (B, 1), out.shape
    # Matmuls use bf16 operands (f32 accumulation), so tolerance vs the pure-f32
    # reference is loosened accordingly.
    assert jnp.allclose(out, ref, atol=5e-2, rtol=5e-2), "mismatch vs reference"

    print("KERNEL_OK")
</pallas_src>

<mosaic_0001>
module attributes {stable_mosaic.version = 11 : i64} {
  func.func @_mlp_kernel(%arg0: i32, %arg1: memref<8x32xbf16, #tpu.memory_space<vmem>>, %arg2: memref<32x512xbf16, #tpu.memory_space<vmem>>, %arg3: memref<1x512xf32, #tpu.memory_space<vmem>>, %arg4: memref<512x128xbf16, #tpu.memory_space<vmem>>, %arg5: memref<1x128xf32, #tpu.memory_space<vmem>>, %arg6: memref<1x128xf32, #tpu.memory_space<vmem>>, %arg7: memref<1xf32, #tpu.memory_space<smem>>, %arg8: memref<1x1x8xf32, #tpu.memory_space<vmem>>) attributes {dimension_semantics = [#tpu.dimension_semantics<parallel>], iteration_bounds = array<i64: 1>, scalar_prefetch = 0 : i64, scratch_operands = 0 : i64, tpu.core_type = #tpu.core_type<tc>, window_params = [{transform_indices = @transform_0, window_bounds = array<i64: 8, 32>}, {pipeline_mode = #tpu.pipeline_mode<synchronous>, transform_indices = @transform_1, window_bounds = array<i64: 32, 512>}, {pipeline_mode = #tpu.pipeline_mode<synchronous>, transform_indices = @transform_2, window_bounds = array<i64: 1, 512>}, {pipeline_mode = #tpu.pipeline_mode<synchronous>, transform_indices = @transform_3, window_bounds = array<i64: 512, 128>}, {pipeline_mode = #tpu.pipeline_mode<synchronous>, transform_indices = @transform_4, window_bounds = array<i64: 1, 128>}, {pipeline_mode = #tpu.pipeline_mode<synchronous>, transform_indices = @transform_5, window_bounds = array<i64: 1, 128>}, {transform_indices = @transform_6, window_bounds = array<i64: 1>}, {transform_indices = @transform_7, window_bounds = array<i64: 1, 1, 8>}]} {
    %c0 = arith.constant 0 : index
    %c0_0 = arith.constant 0 : index
    %0 = vector.load %arg1[%c0, %c0_0] : memref<8x32xbf16, #tpu.memory_space<vmem>>, vector<8x32xbf16>
    %c0_1 = arith.constant 0 : index
    %c0_2 = arith.constant 0 : index
    %1 = vector.load %arg2[%c0_1, %c0_2] : memref<32x512xbf16, #tpu.memory_space<vmem>>, vector<32x512xbf16>
    %cst = arith.constant dense<0.000000e+00> : vector<8x512xf32>
    %2 = tpu.matmul %0, %1, %cst {dimension_numbers = #tpu.dot_dimension_numbers<[1], [0], [0], [1], [0, 0, 1, 1], [], []>} : vector<8x32xbf16>, vector<32x512xbf16>, vector<8x512xf32> -> vector<8x512xf32>
    %c0_3 = arith.constant 0 : index
    %c0_4 = arith.constant 0 : index
    %3 = vector.load %arg3[%c0_3, %c0_4] : memref<1x512xf32, #tpu.memory_space<vmem>>, vector<1x512xf32>
    %4 = vector.broadcast %3 : vector<1x512xf32> to vector<8x512xf32>
    %5 = arith.addf %2, %4 : vector<8x512xf32>
    %cst_5 = arith.constant 0.000000e+00 : f32
    %6 = vector.broadcast %cst_5 : f32 to vector<8x512xf32>
    %7 = arith.maximumf %5, %6 : vector<8x512xf32>
    %8 = arith.truncf %7 : vector<8x512xf32> to vector<8x512xbf16>
    %c0_6 = arith.constant 0 : index
    %c0_7 = arith.constant 0 : index
    %9 = vector.load %arg4[%c0_6, %c0_7] : memref<512x128xbf16, #tpu.memory_space<vmem>>, vector<512x128xbf16>
    %cst_8 = arith.constant dense<0.000000e+00> : vector<8x128xf32>
    %10 = tpu.matmul %8, %9, %cst_8 {dimension_numbers = #tpu.dot_dimension_numbers<[1], [0], [0], [1], [0, 0, 1, 1], [], []>} : vector<8x512xbf16>, vector<512x128xbf16>, vector<8x128xf32> -> vector<8x128xf32>
    %c0_9 = arith.constant 0 : index
    %c0_10 = arith.constant 0 : index
    %11 = vector.load %arg5[%c0_9, %c0_10] : memref<1x128xf32, #tpu.memory_space<vmem>>, vector<1x128xf32>
    %12 = vector.broadcast %11 : vector<1x128xf32> to vector<8x128xf32>
    %13 = arith.addf %10, %12 : vector<8x128xf32>
    %cst_11 = arith.constant 0.000000e+00 : f32
    %14 = vector.broadcast %cst_11 : f32 to vector<8x128xf32>
    %15 = arith.maximumf %13, %14 : vector<8x128xf32>
    %c0_12 = arith.constant 0 : index
    %c0_13 = arith.constant 0 : index
    %16 = vector.load %arg6[%c0_12, %c0_13] : memref<1x128xf32, #tpu.memory_space<vmem>>, vector<1x128xf32>
    %17 = tpu.transpose %15, [1, 0] : vector<8x128xf32> -> vector<128x8xf32>
    %cst_14 = arith.constant dense<0.000000e+00> : vector<1x8xf32>
    %18 = tpu.matmul %16, %17, %cst_14 {dimension_numbers = #tpu.dot_dimension_numbers<[1], [0], [0], [1], [0, 0, 1, 1], [], []>} : vector<1x128xf32>, vector<128x8xf32>, vector<1x8xf32> -> vector<1x8xf32>
    %c0_15 = arith.constant 0 : index
    %19 = memref.load %arg7[%c0_15] : memref<1xf32, #tpu.memory_space<smem>>
    %20 = vector.broadcast %19 : f32 to vector<1x8xf32>
    %21 = arith.addf %18, %20 : vector<1x8xf32>
    %c0_16 = arith.constant 0 : index
    %c0_17 = arith.constant 0 : index
    %c0_18 = arith.constant 0 : index
    %22 = vector.load %arg8[%c0_16, %c0_17, %c0_18] : memref<1x1x8xf32, #tpu.memory_space<vmem>>, vector<1x1x8xf32>
    %23 = vector.shape_cast %22 : vector<1x1x8xf32> to vector<1x8xf32>
    %24 = vector.shape_cast %21 : vector<1x8xf32> to vector<1x1x8xf32>
    tpu.vector_store %arg8[%c0_16, %c0_17, %c0_18], %24 {strides = array<i32>} : memref<1x1x8xf32, #tpu.memory_space<vmem>>, vector<1x1x8xf32>,
    return
  }
  func.func @transform_0(%arg0: i32) -> (i32, i32) {
    %c0_i32 = arith.constant 0 : i32
    %c0_i32_0 = arith.constant 0 : i32
    return %arg0, %c0_i32 : i32, i32
  }
  func.func @transform_1(%arg0: i32) -> (i32, i32) {
    %c0_i32 = arith.constant 0 : i32
    %c0_i32_0 = arith.constant 0 : i32
    %c0_i32_1 = arith.constant 0 : i32
    return %c0_i32, %c0_i32_0 : i32, i32
  }
  func.func @transform_2(%arg0: i32) -> (i32, i32) {
    %c0_i32 = arith.constant 0 : i32
    %c0_i32_0 = arith.constant 0 : i32
    %c0_i32_1 = arith.constant 0 : i32
    return %c0_i32, %c0_i32_0 : i32, i32
  }
  func.func @transform_3(%arg0: i32) -> (i32, i32) {
    %c0_i32 = arith.constant 0 : i32
    %c0_i32_0 = arith.constant 0 : i32
    %c0_i32_1 = arith.constant 0 : i32
    return %c0_i32, %c0_i32_0 : i32, i32
  }
  func.func @transform_4(%arg0: i32) -> (i32, i32) {
    %c0_i32 = arith.constant 0 : i32
    %c0_i32_0 = arith.constant 0 : i32
    %c0_i32_1 = arith.constant 0 : i32
    return %c0_i32, %c0_i32_0 : i32, i32
  }
  func.func @transform_5(%arg0: i32) -> (i32, i32) {
    %c0_i32 = arith.constant 0 : i32
    %c0_i32_0 = arith.constant 0 : i32
    %c0_i32_1 = arith.constant 0 : i32
    return %c0_i32, %c0_i32_0 : i32, i32
  }
  func.func @transform_6(%arg0: i32) -> i32 {
    %c0_i32 = arith.constant 0 : i32
    %c0_i32_0 = arith.constant 0 : i32
    return %c0_i32 : i32
  }
  func.func @transform_7(%arg0: i32) -> (i32, i32, i32) {
    %c0_i32 = arith.constant 0 : i32
    %c0_i32_0 = arith.constant 0 : i32
    %c0_i32_1 = arith.constant 0 : i32
    return %arg0, %c0_i32, %c0_i32_0 : i32, i32, i32
  }
}

</mosaic_0001>

<llo_original>
// kernel: tpu_custom_call.1
$region0: #{tpu_custom_call.1}
  #allocation0 [shape = 'u32[]', space=smem, size = 0x4, offset = 0x4, fixed_abs, tag = 'smem constant byte address 0x4 - core index']
  #allocation1 [shape = 'u32[144,128]{1,0:T(1,128)}', space=vmem, size = 0x12000, scoped, tag = 'internal scratch']
  #allocation2 [shape = 'f32[1]{0:T(128)S(6)}', space=smem, size = 0x200, scoped, tag = 'scoped memory for tpu_custom_call.1']
  %s0 = inlined_call_operand.hbm [shape: bf16[8,32], index: 0, kind: input, shape index: {}]
  %s1 = inlined_call_operand.hbm [shape: bf16[32,512], index: 1, kind: input, shape index: {}]
  %s2 = inlined_call_operand.vmem [shape: f32[1,512], index: 2, kind: input, shape index: {}]
  %s3 = inlined_call_operand.hbm [shape: bf16[512,128], index: 3, kind: input, shape index: {}]
  %s4 = inlined_call_operand.vmem [shape: f32[1,128], index: 4, kind: input, shape index: {}]
  %s5 = inlined_call_operand.vmem [shape: f32[1,128], index: 5, kind: input, shape index: {}]
  %s6 = inlined_call_operand.<no memory space> [shape: f32[1], index: 6, kind: input, shape index: {}]
  %s7 = inlined_call_operand.hbm [shape: f32[1,1,8], index: 7, kind: output, shape index: {}]
  %s8 = sld [smem:[#allocation0]]
  $region50: #{tpu_custom_call.1} parent=0
    _
  %s10 = ssub.s32 1, %s8
  %s11 = scalar_select 0, %s10, %s8
  %12 = sst [smem:[#allocation2]] %s6
  $region1: #{tpu_custom_call.1} parent=0
    #allocation3 [shape = 'u8[2048]{0}', space=vmem, size = 0x800, scoped, tag = 'input window, operand 0, single buffered']
    #allocation4 [shape = 's32[1]{0}', space=sflag, size = 0x4, scoped, tag = 'scoped memory for tpu_custom_call.1']
    #allocation5 [shape = 's32[1]{0}', space=sflag, size = 0x4, scoped, tag = 'scoped memory for tpu_custom_call.1']
    #allocation6 [shape = 'u8[32768]{0}', space=vmem, size = 0x8000, scoped, tag = 'input window, operand 1, single buffered']
    #allocation7 [shape = 's32[1]{0}', space=sflag, size = 0x4, scoped, tag = 'scoped memory for tpu_custom_call.1']
    #allocation8 [shape = 'u8[131072]{0}', space=vmem, size = 0x20000, scoped, tag = 'input window, operand 3, single buffered']
    #allocation9 [shape = 'u8[512]{0}', space=vmem, size = 0x400, scoped, tag = 'output window, operand 0, single buffered']
    %13 = vsyncpa [#allocation4], 0
    %14 = vsyncpa [#allocation7], 0
    %15 = vsyncpa [#allocation5], 0
    // Predicated region
    $region2: #{tpu_custom_call.1} parent=1 // pred_check
      _
    $region3: #{tpu_custom_call.1} parent=1 // pred_check_branch
      %17 = sbr.rel (0) target = $region5
    $region4: #{tpu_custom_call.1} parent=1 // pred_region
      %s19 = ssub.s32 64, 64
      %20 = vsyncadd [#allocation4], %s19
      %s22 = sshll.u32 [#allocation3], 4
      %s23 = int_to_ptr.vmem [resolvable:$true] %s22
      %25 = dma.hbm_to_vmem [thread:$0]  %s0, 64, %s23, [#allocation4]
    $region5: #{tpu_custom_call.1} parent=1 // pred_fallthru
      _
    // Predicated region
    $region6: #{tpu_custom_call.1} parent=1 // pred_check
      _
    $region7: #{tpu_custom_call.1} parent=1 // pred_check_branch
      %27 = sbr.rel (0) target = $region9
    $region8: #{tpu_custom_call.1} parent=1 // pred_region
      %s29 = ssub.s32 1024, 1024
      %30 = vsyncadd [#allocation7], %s29
      %s31 = sshll.u32 [#allocation6], 4
      %s32 = int_to_ptr.vmem [resolvable:$true] %s31
      %37 = dma.hbm_to_vmem [thread:$0]  %s1, 1024, %s32, [#allocation7], 256, 256, 16
    $region9: #{tpu_custom_call.1} parent=1 // pred_fallthru
      _
    // Predicated region
    $region10: #{tpu_custom_call.1} parent=1 // pred_check
      _
    $region11: #{tpu_custom_call.1} parent=1 // pred_check_branch
      %39 = sbr.rel (0) target = $region13
    $region12: #{tpu_custom_call.1} parent=1 // pred_region
      _
    $region13: #{tpu_custom_call.1} parent=1 // pred_fallthru
      _
    // Predicated region
    $region14: #{tpu_custom_call.1} parent=1 // pred_check
      _
    $region15: #{tpu_custom_call.1} parent=1 // pred_check_branch
      %41 = sbr.rel (0) target = $region17
    $region16: #{tpu_custom_call.1} parent=1 // pred_region
      %s43 = ssub.s32 4096, 4096
      %44 = vsyncadd [#allocation7], %s43
      %s45 = sshll.u32 [#allocation8], 4
      %s46 = int_to_ptr.vmem [resolvable:$true] %s45
      %51 = dma.hbm_to_vmem [thread:$0]  %s3, 4096, %s46, [#allocation7], 64, 64, 4
    $region17: #{tpu_custom_call.1} parent=1 // pred_fallthru
      _
    // Predicated region
    $region18: #{tpu_custom_call.1} parent=1 // pred_check
      _
    $region19: #{tpu_custom_call.1} parent=1 // pred_check_branch
      %53 = sbr.rel (0) target = $region21
    $region20: #{tpu_custom_call.1} parent=1 // pred_region
      _
    $region21: #{tpu_custom_call.1} parent=1 // pred_fallthru
      _
    // Predicated region
    $region22: #{tpu_custom_call.1} parent=1 // pred_check
      _
    $region23: #{tpu_custom_call.1} parent=1 // pred_check_branch
      %55 = sbr.rel (0) target = $region25
    $region24: #{tpu_custom_call.1} parent=1 // pred_region
      _
    $region25: #{tpu_custom_call.1} parent=1 // pred_fallthru
      _
    // Predicated region
    $region26: #{tpu_custom_call.1} parent=1 // pred_check
      _
    $region27: #{tpu_custom_call.1} parent=1 // pred_check_branch
      %57 = sbr.rel (0) target = $region29
    $region28: #{tpu_custom_call.1} parent=1 // pred_region
      _
    $region29: #{tpu_custom_call.1} parent=1 // pred_fallthru
      _
    // Predicated region
    $region30: #{tpu_custom_call.1} parent=1 // pred_check
      _
    $region31: #{tpu_custom_call.1} parent=1 // pred_check_branch
      %59 = sbr.rel (0) target = $region33
    $region32: #{tpu_custom_call.1} parent=1 // pred_region
      %60 = dma.done [#allocation4], 64
    $region33: #{tpu_custom_call.1} parent=1 // pred_fallthru
      _
    // Predicated region
    $region34: #{tpu_custom_call.1} parent=1 // pred_check
      _
    $region35: #{tpu_custom_call.1} parent=1 // pred_check_branch
      %62 = sbr.rel (0) target = $region37
    $region36: #{tpu_custom_call.1} parent=1 // pred_region
      %63 = dma.done [#allocation7], 1024
    $region37: #{tpu_custom_call.1} parent=1 // pred_fallthru
      _
    // Predicated region
    $region38: #{tpu_custom_call.1} parent=1 // pred_check
      _
    $region39: #{tpu_custom_call.1} parent=1 // pred_check_branch
      %65 = sbr.rel (0) target = $region41
    $region40: #{tpu_custom_call.1} parent=1 // pred_region
      %66 = dma.done [#allocation7], 4096
    $region41: #{tpu_custom_call.1} parent=1 // pred_fallthru
      _
    %v68 = vld [vmem:[#allocation3] sm:$0xf]
    %v69 = vld [vmem:[#allocation6] sm:$0xff]
    %v70 = vld [vmem:[#allocation6 + $0x8] sm:$0xff]
    %v71 = vld [vmem:[#allocation6 + $0x10] sm:$0xff]
    %v72 = vld [vmem:[#allocation6 + $0x18] sm:$0xff]
    %v73 = vld [vmem:[#allocation6 + $0x20] sm:$0xff]
    %v74 = vld [vmem:[#allocation6 + $0x28] sm:$0xff]
    %v75 = vld [vmem:[#allocation6 + $0x30] sm:$0xff]
    %v76 = vld [vmem:[#allocation6 + $0x38] sm:$0xff]
    %v77 = vld [vmem:[%s2] sm:$0xf]
    %v79 = vlaneseq
    %v80 = vshrl.u32 %v79, 7
    %v81 = vsub.s32 0, %v80
    %v82 = vrot.slane %v77, %v81
    %v83 = vlaneseq
    %v84 = vshrl.u32 %v83, 7
    %v85 = vsub.s32 1, %v84
    %v86 = vrot.slane %v77, %v85
    %v87 = vlaneseq
    %v88 = vshrl.u32 %v87, 7
    %v89 = vsub.s32 2, %v88
    %v90 = vrot.slane %v77, %v89
    %v91 = vlaneseq
    %v92 = vshrl.u32 %v91, 7
    %v93 = vsub.s32 3, %v92
    %v94 = vrot.slane %v77, %v93
    %v107 = vunpack.c.l.b16 %v69
    %v108 = vunpack.c.h.b16 %v69
    %v109 = vunpack.c.l.b16 %v70
    %v110 = vunpack.c.h.b16 %v70
    %v111 = vunpack.c.l.b16 %v71
    %v112 = vunpack.c.h.b16 %v71
    %v113 = vunpack.c.l.b16 %v72
    %v114 = vunpack.c.h.b16 %v72
    %v115 = vunpack.c.l.b16 %v73
    %v116 = vunpack.c.h.b16 %v73
    %v117 = vunpack.c.l.b16 %v74
    %v118 = vunpack.c.h.b16 %v74
    %v119 = vunpack.c.l.b16 %v75
    %v120 = vunpack.c.h.b16 %v75
    %v121 = vunpack.c.l.b16 %v76
    %v122 = vunpack.c.h.b16 %v76
    %v123 = vpack.c.b16 %v111, %v107
    %v124 = vpack.c.b16 %v112, %v108
    %v125 = vpack.c.b16 %v113, %v109
    %v126 = vpack.c.b16 %v114, %v110
    %v127 = vpack.c.b16 %v119, %v115
    %v128 = vpack.c.b16 %v120, %v116
    %v129 = vpack.c.b16 %v121, %v117
    %v130 = vpack.c.b16 %v122, %v118
    %vm139 = vcmask 261120
    %v141 = vsel %vm139, %v68, 0
    %143 = vmatprep.subr.bf16.mxu0 0
    %144 = vmatpush1.bf16.msra.mxu0 0
    %145 = vmatprep.subr.bf16.mxu0 0
    %146 = vmatpush1.bf16.msra.mxu0 0
    %147 = vmatprep.subr.bf16.mxu0 0
    %148 = vmatpush1.bf16.msra.mxu0 0
    %149 = vmatprep.subr.bf16.mxu0 0
    %150 = vmatpush1.bf16.msra.mxu0 0
    %151 = vmatprep.subr.bf16.mxu0 0
    %152 = vmatpush1.bf16.msra.mxu0 0
    %153 = vmatprep.subr.bf16.mxu0 0
    %154 = vmatpush1.bf16.msra.mxu0 0
    %155 = vmatprep.subr.bf16.mxu0 %v128
    %156 = vmatpush1.bf16.msra.mxu0 %v127
    %157 = vmatprep.subr.bf16.mxu0 %v124
    %158 = vmatpush1.bf16.msra.mxu0 %v123
    %159 = vmatprep.subr.bf16.mxu0 0
    %160 = vmatpush2.bf16.msra.mxu0 0
    %161 = vmatprep.subr.bf16.mxu0 0
    %162 = vmatpush2.bf16.msra.mxu0 0
    %163 = vmatprep.subr.bf16.mxu0 0
    %164 = vmatpush2.bf16.msra.mxu0 0
    %165 = vmatprep.subr.bf16.mxu0 0
    %166 = vmatpush2.bf16.msra.mxu0 0
    %167 = vmatprep.subr.bf16.mxu0 0
    %168 = vmatpush2.bf16.msra.mxu0 0
    %169 = vmatprep.subr.bf16.mxu0 0
    %170 = vmatpush2.bf16.msra.mxu0 0
    %171 = vmatprep.subr.bf16.mxu0 0
    %172 = vmatpush2.bf16.msra.mxu0 0
    %173 = vmatprep.subr.bf16.mxu0 0
    %174 = vmatpush2.bf16.msra.mxu0 0
    %175 = vmatprep.mubr.bf16.mxu0 0
    %176 = vmatmul.mubr.bf16.gmra.mxu0 %v141
    %v177 = vpop.f32.mrf.mxu0
    %v178 = vadd.f32 %v82, %v177
    %v179 = vpop.f32.mrf.mxu0
    %v180 = vadd.f32 %v86, %v179
    %v181 = vpop.f32.mrf.mxu0
    %v182 = vpop.f32.mrf.mxu0
    %183 = vdwg.mxu0
    %184 = vmatprep.subr.bf16.mxu0 0
    %185 = vmatpush1.bf16.msra.mxu0 0
    %186 = vmatprep.subr.bf16.mxu0 0
    %187 = vmatpush1.bf16.msra.mxu0 0
    %188 = vmatprep.subr.bf16.mxu0 0
    %189 = vmatpush1.bf16.msra.mxu0 0
    %190 = vmatprep.subr.bf16.mxu0 0
    %191 = vmatpush1.bf16.msra.mxu0 0
    %192 = vmatprep.subr.bf16.mxu0 0
    %193 = vmatpush1.bf16.msra.mxu0 0
    %194 = vmatprep.subr.bf16.mxu0 0
    %195 = vmatpush1.bf16.msra.mxu0 0
    %196 = vmatprep.subr.bf16.mxu0 %v130
    %197 = vmatpush1.bf16.msra.mxu0 %v129
    %198 = vmatprep.subr.bf16.mxu0 %v126
    %199 = vmatpush1.bf16.msra.mxu0 %v125
    %200 = vmatprep.subr.bf16.mxu0 0
    %201 = vmatpush2.bf16.msra.mxu0 0
    %202 = vmatprep.subr.bf16.mxu0 0
    %203 = vmatpush2.bf16.msra.mxu0 0
    %204 = vmatprep.subr.bf16.mxu0 0
    %205 = vmatpush2.bf16.msra.mxu0 0
    %206 = vmatprep.subr.bf16.mxu0 0
    %207 = vmatpush2.bf16.msra.mxu0 0
    %208 = vmatprep.subr.bf16.mxu0 0
    %209 = vmatpush2.bf16.msra.mxu0 0
    %210 = vmatprep.subr.bf16.mxu0 0
    %211 = vmatpush2.bf16.msra.mxu0 0
    %212 = vmatprep.subr.bf16.mxu0 0
    %213 = vmatpush2.bf16.msra.mxu0 0
    %214 = vmatprep.subr.bf16.mxu0 0
    %215 = vmatpush2.bf16.msra.mxu0 0
    %216 = vmatprep.mubr.bf16.mxu0 0
    %217 = vmatmul.mubr.bf16.gmra.mxu0 %v141
    %v218 = vpop.f32.mrf.mxu0
    %v219 = vadd.f32 %v90, %v218
    %v220 = vpop.f32.mrf.mxu0
    %v221 = vadd.f32 %v94, %v220
    %v222 = vpop.f32.mrf.mxu0
    %v223 = vpop.f32.mrf.mxu0
    %224 = vdwg.mxu0
    %v225 = vmax.f32 %v178, 0.0
    %v226 = vmax.f32 %v180, 0.0
    %v227 = vmax.f32 %v219, 0.0
    %v228 = vmax.f32 %v221, 0.0
    %v229 = vpack.c.bf16 %v225, %v225
    %v230 = vpack.c.bf16 %v226, %v226
    %v231 = vpack.c.bf16 %v227, %v227
    %v232 = vpack.c.bf16 %v228, %v228
    %v233 = vld [vmem:[#allocation8] sm:$0xf]
    %v234 = vld [vmem:[#allocation8 + $0x4] sm:$0xf]
    %v235 = vld [vmem:[#allocation8 + $0x8] sm:$0xf]
    %v236 = vld [vmem:[#allocation8 + $0xc] sm:$0xf]
    %v237 = vld [vmem:[#allocation8 + $0x10] sm:$0xf]
    %v238 = vld [vmem:[#allocation8 + $0x14] sm:$0xf]
    %v239 = vld [vmem:[#allocation8 + $0x18] sm:$0xf]
    %v240 = vld [vmem:[#allocation8 + $0x1c] sm:$0xf]
    %v241 = vld [vmem:[#allocation8 + $0x20] sm:$0xf]
    %v242 = vld [vmem:[#allocation8 + $0x24] sm:$0xf]
    %v243 = vld [vmem:[#allocation8 + $0x28] sm:$0xf]
    %v244 = vld [vmem:[#allocation8 + $0x2c] sm:$0xf]
    %v245 = vld [vmem:[#allocation8 + $0x30] sm:$0xf]
    %v246 = vld [vmem:[#allocation8 + $0x34] sm:$0xf]
    %v247 = vld [vmem:[#allocation8 + $0x38] sm:$0xf]
    %v248 = vld [vmem:[#allocation8 + $0x3c] sm:$0xf]
    %v249 = vld [vmem:[#allocation8 + $0x40] sm:$0xf]
    %v250 = vld [vmem:[#allocation8 + $0x44] sm:$0xf]
    %v251 = vld [vmem:[#allocation8 + $0x48] sm:$0xf]
    %v252 = vld [vmem:[#allocation8 + $0x4c] sm:$0xf]
    %v253 = vld [vmem:[#allocation8 + $0x50] sm:$0xf]
    %v254 = vld [vmem:[#allocation8 + $0x54] sm:$0xf]
    %v255 = vld [vmem:[#allocation8 + $0x58] sm:$0xf]
    %v256 = vld [vmem:[#allocation8 + $0x5c] sm:$0xf]
    %v257 = vld [vmem:[#allocation8 + $0x60] sm:$0xf]
    %v258 = vld [vmem:[#allocation8 + $0x64] sm:$0xf]
    %v259 = vld [vmem:[#allocation8 + $0x68] sm:$0xf]
    %v260 = vld [vmem:[#allocation8 + $0x6c] sm:$0xf]
    %v261 = vld [vmem:[#allocation8 + $0x70] sm:$0xf]
    %v262 = vld [vmem:[#allocation8 + $0x74] sm:$0xf]
    %v263 = vld [vmem:[#allocation8 + $0x78] sm:$0xf]
    %v264 = vld [vmem:[#allocation8 + $0x7c] sm:$0xf]
    %v265 = vld [vmem:[#allocation8 + $0x80] sm:$0xf]
    %v266 = vld [vmem:[#allocation8 + $0x84] sm:$0xf]
    %v267 = vld [vmem:[#allocation8 + $0x88] sm:$0xf]
    %v268 = vld [vmem:[#allocation8 + $0x8c] sm:$0xf]
    %v269 = vld [vmem:[#allocation8 + $0x90] sm:$0xf]
    %v270 = vld [vmem:[#allocation8 + $0x94] sm:$0xf]
    %v271 = vld [vmem:[#allocation8 + $0x98] sm:$0xf]
    %v272 = vld [vmem:[#allocation8 + $0x9c] sm:$0xf]
    %v273 = vld [vmem:[#allocation8 + $0xa0] sm:$0xf]
    %v274 = vld [vmem:[#allocation8 + $0xa4] sm:$0xf]
    %v275 = vld [vmem:[#allocation8 + $0xa8] sm:$0xf]
    %v276 = vld [vmem:[#allocation8 + $0xac] sm:$0xf]
    %v277 = vld [vmem:[#allocation8 + $0xb0] sm:$0xf]
    %v278 = vld [vmem:[#allocation8 + $0xb4] sm:$0xf]
    %v279 = vld [vmem:[#allocation8 + $0xb8] sm:$0xf]
    %v280 = vld [vmem:[#allocation8 + $0xbc] sm:$0xf]
    %v281 = vld [vmem:[#allocation8 + $0xc0] sm:$0xf]
    %v282 = vld [vmem:[#allocation8 + $0xc4] sm:$0xf]
    %v283 = vld [vmem:[#allocation8 + $0xc8] sm:$0xf]
    %v284 = vld [vmem:[#allocation8 + $0xcc] sm:$0xf]
    %v285 = vld [vmem:[#allocation8 + $0xd0] sm:$0xf]
    %v286 = vld [vmem:[#allocation8 + $0xd4] sm:$0xf]
    %v287 = vld [vmem:[#allocation8 + $0xd8] sm:$0xf]
    %v288 = vld [vmem:[#allocation8 + $0xdc] sm:$0xf]
    %v289 = vld [vmem:[#allocation8 + $0xe0] sm:$0xf]
    %v290 = vld [vmem:[#allocation8 + $0xe4] sm:$0xf]
    %v291 = vld [vmem:[#allocation8 + $0xe8] sm:$0xf]
    %v292 = vld [vmem:[#allocation8 + $0xec] sm:$0xf]
    %v293 = vld [vmem:[#allocation8 + $0xf0] sm:$0xf]
    %v294 = vld [vmem:[#allocation8 + $0xf4] sm:$0xf]
    %v295 = vld [vmem:[#allocation8 + $0xf8] sm:$0xf]
    %v296 = vld [vmem:[#allocation8 + $0xfc] sm:$0xf]
    %v297 = vld [vmem:[%s4] sm:$0x1]
    %v299 = vlaneseq
    %v300 = vshrl.u32 %v299, 7
    %v301 = vsub.s32 0, %v300
    %v302 = vrot.slane %v297, %v301
    %v368 = vunpack.c.l.b16 %v233
    %v369 = vunpack.c.l.b16 %v234
    %v370 = vunpack.c.l.b16 %v235
    %v371 = vunpack.c.l.b16 %v236
    %v372 = vunpack.c.l.b16 %v237
    %v373 = vunpack.c.l.b16 %v238
    %v374 = vunpack.c.l.b16 %v239
    %v375 = vunpack.c.l.b16 %v240
    %v376 = vunpack.c.l.b16 %v241
    %v377 = vunpack.c.l.b16 %v242
    %v378 = vunpack.c.l.b16 %v243
    %v379 = vunpack.c.l.b16 %v244
    %v380 = vunpack.c.l.b16 %v245
    %v381 = vunpack.c.l.b16 %v246
    %v382 = vunpack.c.l.b16 %v247
    %v383 = vunpack.c.l.b16 %v248
    %v384 = vunpack.c.l.b16 %v249
    %v385 = vunpack.c.l.b16 %v250
    %v386 = vunpack.c.l.b16 %v251
    %v387 = vunpack.c.l.b16 %v252
    %v388 = vunpack.c.l.b16 %v253
    %v389 = vunpack.c.l.b16 %v254
    %v390 = vunpack.c.l.b16 %v255
    %v391 = vunpack.c.l.b16 %v256
    %v392 = vunpack.c.l.b16 %v257
    %v393 = vunpack.c.l.b16 %v258
    %v394 = vunpack.c.l.b16 %v259
    %v395 = vunpack.c.l.b16 %v260
    %v396 = vunpack.c.l.b16 %v261
    %v397 = vunpack.c.l.b16 %v262
    %v398 = vunpack.c.l.b16 %v263
    %v399 = vunpack.c.l.b16 %v264
    %v400 = vunpack.c.l.b16 %v265
    %v401 = vunpack.c.l.b16 %v266
    %v402 = vunpack.c.l.b16 %v267
    %v403 = vunpack.c.l.b16 %v268
    %v404 = vunpack.c.l.b16 %v269
    %v405 = vunpack.c.l.b16 %v270
    %v406 = vunpack.c.l.b16 %v271
    %v407 = vunpack.c.l.b16 %v272
    %v408 = vunpack.c.l.b16 %v273
    %v409 = vunpack.c.l.b16 %v274
    %v410 = vunpack.c.l.b16 %v275
    %v411 = vunpack.c.l.b16 %v276
    %v412 = vunpack.c.l.b16 %v277
    %v413 = vunpack.c.l.b16 %v278
    %v414 = vunpack.c.l.b16 %v279
    %v415 = vunpack.c.l.b16 %v280
    %v416 = vunpack.c.l.b16 %v281
    %v417 = vunpack.c.l.b16 %v282
    %v418 = vunpack.c.l.b16 %v283
    %v419 = vunpack.c.l.b16 %v284
    %v420 = vunpack.c.l.b16 %v285
    %v421 = vunpack.c.l.b16 %v286
    %v422 = vunpack.c.l.b16 %v287
    %v423 = vunpack.c.l.b16 %v288
    %v424 = vunpack.c.l.b16 %v289
    %v425 = vunpack.c.l.b16 %v290
    %v426 = vunpack.c.l.b16 %v291
    %v427 = vunpack.c.l.b16 %v292
    %v428 = vunpack.c.l.b16 %v293
    %v429 = vunpack.c.l.b16 %v294
    %v430 = vunpack.c.l.b16 %v295
    %v431 = vunpack.c.l.b16 %v296
    %v432 = vpack.c.b16 %v369, %v368
    %v433 = vpack.c.b16 %v371, %v370
    %v434 = vpack.c.b16 %v373, %v372
    %v435 = vpack.c.b16 %v375, %v374
    %v436 = vpack.c.b16 %v377, %v376
    %v437 = vpack.c.b16 %v379, %v378
    %v438 = vpack.c.b16 %v381, %v380
    %v439 = vpack.c.b16 %v383, %v382
    %v440 = vpack.c.b16 %v385, %v384
    %v441 = vpack.c.b16 %v387, %v386
    %v442 = vpack.c.b16 %v389, %v388
    %v443 = vpack.c.b16 %v391, %v390
    %v444 = vpack.c.b16 %v393, %v392
    %v445 = vpack.c.b16 %v395, %v394
    %v446 = vpack.c.b16 %v397, %v396
    %v447 = vpack.c.b16 %v399, %v398
    %v448 = vpack.c.b16 %v401, %v400
    %v449 = vpack.c.b16 %v403, %v402
    %v450 = vpack.c.b16 %v405, %v404
    %v451 = vpack.c.b16 %v407, %v406
    %v452 = vpack.c.b16 %v409, %v408
    %v453 = vpack.c.b16 %v411, %v410
    %v454 = vpack.c.b16 %v413, %v412
    %v455 = vpack.c.b16 %v415, %v414
    %v456 = vpack.c.b16 %v417, %v416
    %v457 = vpack.c.b16 %v419, %v418
    %v458 = vpack.c.b16 %v421, %v420
    %v459 = vpack.c.b16 %v423, %v422
    %v460 = vpack.c.b16 %v425, %v424
    %v461 = vpack.c.b16 %v427, %v426
    %v462 = vpack.c.b16 %v429, %v428
    %v463 = vpack.c.b16 %v431, %v430
    %496 = vmatprep.subr.bf16.mxu0 0
    %497 = vmatpush1.bf16.msra.mxu0 %v439
    %498 = vmatprep.subr.bf16.mxu0 0
    %499 = vmatpush1.bf16.msra.mxu0 %v438
    %500 = vmatprep.subr.bf16.mxu0 0
    %501 = vmatpush1.bf16.msra.mxu0 %v437
    %502 = vmatprep.subr.bf16.mxu0 0
    %503 = vmatpush1.bf16.msra.mxu0 %v436
    %504 = vmatprep.subr.bf16.mxu0 0
    %505 = vmatpush1.bf16.msra.mxu0 %v435
    %506 = vmatprep.subr.bf16.mxu0 0
    %507 = vmatpush1.bf16.msra.mxu0 %v434
    %508 = vmatprep.subr.bf16.mxu0 0
    %509 = vmatpush1.bf16.msra.mxu0 %v433
    %510 = vmatprep.subr.bf16.mxu0 0
    %511 = vmatpush1.bf16.msra.mxu0 %v432
    %512 = vmatprep.subr.bf16.mxu0 0
    %513 = vmatpush2.bf16.msra.mxu0 %v447
    %514 = vmatprep.subr.bf16.mxu0 0
    %515 = vmatpush2.bf16.msra.mxu0 %v446
    %516 = vmatprep.subr.bf16.mxu0 0
    %517 = vmatpush2.bf16.msra.mxu0 %v445
    %518 = vmatprep.subr.bf16.mxu0 0
    %519 = vmatpush2.bf16.msra.mxu0 %v444
    %520 = vmatprep.subr.bf16.mxu0 0
    %521 = vmatpush2.bf16.msra.mxu0 %v443
    %522 = vmatprep.subr.bf16.mxu0 0
    %523 = vmatpush2.bf16.msra.mxu0 %v442
    %524 = vmatprep.subr.bf16.mxu0 0
    %525 = vmatpush2.bf16.msra.mxu0 %v441
    %526 = vmatprep.subr.bf16.mxu0 0
    %527 = vmatpush2.bf16.msra.mxu0 %v440
    %528 = vmatprep.mubr.bf16.mxu0 %v230
    %529 = vmatmul.mubr.bf16.gmra.mxu0 %v229
    %v530 = vpop.f32.mrf.mxu0
    %v531 = vadd.f32 %v302, %v530
    %v532 = vpop.f32.mrf.mxu0
    %v533 = vpop.f32.mrf.mxu0
    %v534 = vpop.f32.mrf.mxu0
    %535 = vdwg.mxu0
    %536 = vmatprep.subr.bf16.mxu0 0
    %537 = vmatpush1.bf16.msra.mxu0 %v455
    %538 = vmatprep.subr.bf16.mxu0 0
    %539 = vmatpush1.bf16.msra.mxu0 %v454
    %540 = vmatprep.subr.bf16.mxu0 0
    %541 = vmatpush1.bf16.msra.mxu0 %v453
    %542 = vmatprep.subr.bf16.mxu0 0
    %543 = vmatpush1.bf16.msra.mxu0 %v452
    %544 = vmatprep.subr.bf16.mxu0 0
    %545 = vmatpush1.bf16.msra.mxu0 %v451
    %546 = vmatprep.subr.bf16.mxu0 0
    %547 = vmatpush1.bf16.msra.mxu0 %v450
    %548 = vmatprep.subr.bf16.mxu0 0
    %549 = vmatpush1.bf16.msra.mxu0 %v449
    %550 = vmatprep.subr.bf16.mxu0 0
    %551 = vmatpush1.bf16.msra.mxu0 %v448
    %552 = vmatprep.subr.bf16.mxu0 0
    %553 = vmatpush2.bf16.msra.mxu0 %v463
    %554 = vmatprep.subr.bf16.mxu0 0
    %555 = vmatpush2.bf16.msra.mxu0 %v462
    %556 = vmatprep.subr.bf16.mxu0 0
    %557 = vmatpush2.bf16.msra.mxu0 %v461
    %558 = vmatprep.subr.bf16.mxu0 0
    %559 = vmatpush2.bf16.msra.mxu0 %v460
    %560 = vmatprep.subr.bf16.mxu0 0
    %561 = vmatpush2.bf16.msra.mxu0 %v459
    %562 = vmatprep.subr.bf16.mxu0 0
    %563 = vmatpush2.bf16.msra.mxu0 %v458
    %564 = vmatprep.subr.bf16.mxu0 0
    %565 = vmatpush2.bf16.msra.mxu0 %v457
    %566 = vmatprep.subr.bf16.mxu0 0
    %567 = vmatpush2.bf16.msra.mxu0 %v456
    %568 = vmatprep.mubr.bf16.mxu0 %v232
    %569 = vmatmul.mubr.bf16.gmra.mxu0 %v231
    %v570 = vpop.f32.mrf.mxu0
    %v571 = vadd.f32 %v531, %v570
    %v572 = vpop.f32.mrf.mxu0
    %v573 = vpop.f32.mrf.mxu0
    %v574 = vpop.f32.mrf.mxu0
    %575 = vdwg.mxu0
    %v576 = vmax.f32 %v571, 0.0
    %v577 = vld [vmem:[%s5] sm:$0x1]
    %s578 = sld [smem:[#allocation2]]
    %v579 = vstv %s578
    %580 = vmatprep.subr.mxu0 0.0
    %581 = vmatpush1.xpose.msra.mxu0 0.0
    %582 = vmatprep.subr.mxu0 0.0
    %583 = vmatpush1.xpose.msra.mxu0 0.0
    %584 = vmatprep.subr.mxu0 0.0
    %585 = vmatpush1.xpose.msra.mxu0 0.0
    %586 = vmatprep.subr.mxu0 0.0
    %587 = vmatpush1.xpose.msra.mxu0 0.0
    %588 = vmatprep.subr.mxu0 0.0
    %589 = vmatpush1.xpose.msra.mxu0 0.0
    %590 = vmatprep.subr.mxu0 0.0
    %591 = vmatpush1.xpose.msra.mxu0 0.0
    %592 = vmatprep.subr.mxu0 0.0
    %593 = vmatpush1.xpose.msra.mxu0 0.0
    %594 = vmatprep.subr.mxu0 0.0
    %595 = vmatpush1.xpose.msra.mxu0 0.0
    %596 = vmatprep.subr.mxu0 0.0
    %597 = vmatpush1.xpose.msra.mxu0 0.0
    %598 = vmatprep.subr.mxu0 0.0
    %599 = vmatpush1.xpose.msra.mxu0 0.0
    %600 = vmatprep.subr.mxu0 0.0
    %601 = vmatpush1.xpose.msra.mxu0 0.0
    %602 = vmatprep.subr.mxu0 0.0
    %603 = vmatpush1.xpose.msra.mxu0 0.0
    %604 = vmatprep.subr.mxu0 0.0
    %605 = vmatpush1.xpose.msra.mxu0 0.0
    %606 = vmatprep.subr.mxu0 0.0
    %607 = vmatpush1.xpose.msra.mxu0 0.0
    %608 = vmatprep.subr.mxu0 0.0
    %609 = vmatpush1.xpose.msra.mxu0 0.0
    %610 = vmatprep.subr.mxu0 0.0
    %611 = vmatpush1.xpose.msra.mxu0 %v576
    %612 = vmatprep.subr.mxu0 0.0
    %613 = vmatpush2.xpose.msra.mxu0 0.0
    %614 = vmatprep.subr.mxu0 0.0
    %615 = vmatpush2.xpose.msra.mxu0 0.0
    %616 = vmatprep.subr.mxu0 0.0
    %617 = vmatpush2.xpose.msra.mxu0 0.0
    %618 = vmatprep.subr.mxu0 0.0
    %619 = vmatpush2.xpose.msra.mxu0 0.0
    %620 = vmatprep.subr.mxu0 0.0
    %621 = vmatpush2.xpose.msra.mxu0 0.0
    %622 = vmatprep.subr.mxu0 0.0
    %623 = vmatpush2.xpose.msra.mxu0 0.0
    %624 = vmatprep.subr.mxu0 0.0
    %625 = vmatpush2.xpose.msra.mxu0 0.0
    %626 = vmatprep.subr.mxu0 0.0
    %627 = vmatpush2.xpose.msra.mxu0 0.0
    %628 = vmatprep.subr.mxu0 0.0
    %629 = vmatpush2.xpose.msra.mxu0 0.0
    %630 = vmatprep.subr.mxu0 0.0
    %631 = vmatpush2.xpose.msra.mxu0 0.0
    %632 = vmatprep.subr.mxu0 0.0
    %633 = vmatpush2.xpose.msra.mxu0 0.0
    %634 = vmatprep.subr.mxu0 0.0
    %635 = vmatpush2.xpose.msra.mxu0 0.0
    %636 = vmatprep.subr.mxu0 0.0
    %637 = vmatpush2.xpose.msra.mxu0 0.0
    %638 = vmatprep.subr.mxu0 0.0
    %639 = vmatpush2.xpose.msra.mxu0 0.0
    %640 = vmatprep.subr.mxu0 0.0
    %641 = vmatpush2.xpose.msra.mxu0 0.0
    %642 = vmatprep.subr.mxu0 0.0
    %643 = vmatpush2.xpose.msra.mxu0 0.0
    %644 = vmatprep.mubr.f32.mxu0 0.0
    %645 = vmatmul.mubr.f32.gmra.mxu0 %v577
    %v646 = vpop.f32.mrf.mxu0
    %v647 = vadd.f32 %v579, %v646
    %v648 = vpop.f32.mrf.mxu0
    %649 = vdwg.mxu0
    %vm650 = vcmask 57344
    %651 = vst.msk [vmem:[#allocation9] sm:$0x1] %vm650, %v647
    // Predicated region
    $region42: #{tpu_custom_call.1} parent=1 // pred_check
      _
    $region43: #{tpu_custom_call.1} parent=1 // pred_check_branch
      %653 = sbr.rel (0) target = $region45
    $region44: #{tpu_custom_call.1} parent=1 // pred_region
      %s655 = ssub.s32 16, 16
      %656 = vsyncadd [#allocation5], %s655
      %s658 = sshll.u32 [#allocation9], 4
      %s659 = int_to_ptr.vmem [resolvable:$true] %s658
      %661 = dma.vmem_to_hbm [thread:$0]  %s659, 16, %s7, [#allocation5]
    $region45: #{tpu_custom_call.1} parent=1 // pred_fallthru
      _
    // Predicated region
    $region46: #{tpu_custom_call.1} parent=1 // pred_check
      _
    $region47: #{tpu_custom_call.1} parent=1 // pred_check_branch
      %663 = sbr.rel (0) target = $region49
    $region48: #{tpu_custom_call.1} parent=1 // pred_region
      %664 = dma.done [#allocation5], 16
    $region49: #{tpu_custom_call.1} parent=1 // pred_fallthru
      _
    %665 = vsyncpa [#allocation4], 1
    %666 = vsyncpa [#allocation7], 1
    %667 = vsyncpa [#allocation5], 1

</llo_original>
